<compile_context>
chip_gen: v6e
topology: v6e:2x2x1
jax: 0.10.0
libtpu: 0.0.40
codegen_flags: <defaults>
</compile_context>

<pallas_src>
import functools
import math

import jax
import jax.numpy as jnp
from jax.experimental import pallas as pl
from jax.experimental.pallas import tpu as pltpu

LANES = 128
SUBLANES = 8
MAX_BLOCK_ROWS = 4096  # 4096*128*4B = 2 MiB/input tile; x2 inputs x2 buffers = 8 MiB VMEM


def _int_pow(v, k: int):
    """v**k for a small non-negative integer k using VPU multiplies only."""
    assert k >= 0
    if k == 0:
        return jnp.ones_like(v)
    result = None
    base = v
    while k:
        if k & 1:
            result = base if result is None else result * base
        k >>= 1
        if k:
            base = base * base
    return result


def _mixed_loss_kernel(x_ref, t_ref, out_ref, acc_ref, *, gamma, int_gamma, fast_weight):
    """Partial-sum kernel.

    grid = (outer, inner).  Each outer program owns a contiguous range of
    row-blocks and accumulates 4 partial sums in a (4, 8, LANES) VMEM scratch:
      [0] focal elementwise loss   [1] sigmoid(x)*t
      [2] sigmoid(x)               [3] t
    The scratch is flushed to out_ref[outer] on the last inner step.
    """
    i = pl.program_id(1)

    @pl.when(i == 0)
    def _():
        acc_ref[...] = jnp.zeros_like(acc_ref)

    x = x_ref[...].astype(jnp.float32)
    t = t_ref[...].astype(jnp.float32)

    # Stable BCE-with-logits: max(x,0) - x*t + log(1 + exp(-|x|))
    u = jnp.exp(-jnp.abs(x))                       # EUP exp; reused for sigmoid below
    bce = jnp.maximum(x, 0.0) - x * t + jnp.log(1.0 + u)

    # sigmoid(x) from u without a second exp:  1/(1+u) if x>=0 else u/(1+u)
    # (kept exact; pl.reciprocal(approx=True) was borderline for the 1e-5 check)
    r = 1.0 / (1.0 + u)
    s = jnp.where(x >= 0.0, r, u * r)

    if fast_weight:
        # Binary targets + integer gamma:
        #   sigmoid(-x*(2t-1)) == 1-sigmoid(x) if t==1 else sigmoid(x),
        # expressed cancellation-free from (u, r); weight = p**gamma via VPU
        # multiplies -> zero extra transcendentals.
        one_minus_s = jnp.where(x >= 0.0, u * r, r)
        p = jnp.where(t > 0.5, one_minus_s, s)
        w = _int_pow(p, int_gamma)
    else:
        # General path (soft labels / non-integer gamma) — mirrors PyTorch.
        z = -x * (t * 2.0 - 1.0)
        logsig = jnp.minimum(z, 0.0) - jnp.log(1.0 + jnp.exp(-jnp.abs(z)))
        w = jnp.exp(logsig * gamma)

    focal_elem = w * bce

    def _fold(v):
        # (block_rows, LANES) -> (8, LANES): pure aligned vreg adds (VPU), so the
        # accumulator update is a full-tile RMW (no masked stores).
        return v.reshape(-1, SUBLANES, LANES).sum(axis=0)

    acc_ref[0] += _fold(focal_elem)
    acc_ref[1] += _fold(s * t)
    acc_ref[2] += _fold(s)
    acc_ref[3] += _fold(t)

    @pl.when(i == pl.num_programs(1) - 1)
    def _():
        out_ref[0] = acc_ref[...]


def _tail_sums(x, t, *, gamma):
    """Plain-JAX sums for the < 2-tile tail (keeps the kernel prefix copy-free)."""
    x = x.astype(jnp.float32)
    t = t.astype(jnp.float32)
    max_val = jnp.maximum(-x, 0.0)
    bce = x - x * t + max_val + jnp.log(jnp.exp(-max_val) + jnp.exp(-x - max_val))
    invprobs = jax.nn.log_sigmoid(-x * (t * 2.0 - 1.0))
    focal = jnp.exp(invprobs * gamma) * bce
    s = jax.nn.sigmoid(x)
    return jnp.sum(focal), jnp.sum(s * t), jnp.sum(s), jnp.sum(t)


def _default_n_outer():
    """2 outer programs only on 2-TensorCore chips (v7x); 1 elsewhere."""
    try:
        kind = jax.devices()[0].device_kind.lower()
    except Exception:
        return 1
    return 2 if ("v7" in kind or "7x" in kind) else 1


def mixed_loss_pallas(x, target, *, alpha, gamma, binary_target=None,
                      max_block_rows=MAX_BLOCK_ROWS, n_outer=None):
    """alpha * FocalLoss(gamma)(x, target) - log(dice_loss(x, target)); scalar.

    Inputs may be narrow dtypes (bf16 logits, int targets) — they stream through
    HBM in native dtype and are upcast in-kernel.
    """
    assert x.shape == target.shape
    n = x.size

    xf = x.reshape(-1)
    tf = target.reshape(-1)

    if binary_target is None:
        binary_target = (target.dtype == jnp.bool_) or jnp.issubdtype(target.dtype, jnp.integer)
    g = float(gamma)
    int_gamma = int(round(g)) if (0.0 <= g <= 64.0 and g == round(g)) else None
    fast_weight = bool(binary_target) and (int_gamma is not None)

    if n_outer is None:
        n_outer = _default_n_outer()

    rows_needed = pl.cdiv(n, LANES)
    rows_8 = pl.cdiv(rows_needed, SUBLANES) * SUBLANES
    block_rows = min(max_block_rows, rows_8)       # shrink tile for tiny inputs
    tile = block_rows * LANES

    n_full = n // tile
    if n_full == 0:
        # Sub-tile input: pad (< one (8,128)-aligned tile worth of zeros) and
        # correct the zero contribution analytically in the scalar epilogue.
        n_outer_eff, n_inner = 1, 1
        pad = tile - n
        tail = 0
        n_main = n
        x_main = jnp.pad(xf, (0, pad))
        t_main = jnp.pad(tf, (0, pad))
        rows_main = block_rows
    else:
        # Tile-aligned prefix through the kernel; remainder handled in JAX.
        n_outer_eff = max(1, min(n_outer, n_full))
        n_inner = n_full // n_outer_eff
        rows_main = n_outer_eff * n_inner * block_rows
        n_main = rows_main * LANES
        pad = 0
        tail = n - n_main
        x_main = xf[:n_main]
        t_main = tf[:n_main]

    x2 = x_main.reshape(rows_main, LANES)
    t2 = t_main.reshape(rows_main, LANES)

    kernel = functools.partial(
        _mixed_loss_kernel,
        gamma=g,
        int_gamma=(int_gamma if fast_weight else 0),
        fast_weight=fast_weight,
    )

    in_map = lambda o, i: (o * n_inner + i, 0)
    out_map = lambda o, i: (o, 0, 0, 0)

    def _call(dim_sems):
        return pl.pallas_call(
            kernel,
            out_shape=jax.ShapeDtypeStruct((n_outer_eff, 4, SUBLANES, LANES), jnp.float32),
            grid=(n_outer_eff, n_inner),
            in_specs=[
                pl.BlockSpec((block_rows, LANES), in_map),
                pl.BlockSpec((block_rows, LANES), in_map),
            ],
            out_specs=pl.BlockSpec((1, 4, SUBLANES, LANES), out_map),
            scratch_shapes=[pltpu.VMEM((4, SUBLANES, LANES), jnp.float32)],
            compiler_params=pltpu.CompilerParams(dimension_semantics=dim_sems),
        )(x2, t2)

    if n_outer_eff > 1:
        try:
            # v7x: shard the outer axis across both TensorCores.
            partials = _call((pltpu.CORE_PARALLEL, pltpu.ARBITRARY))
        except Exception:
            partials = _call((pltpu.PARALLEL, pltpu.ARBITRARY))
    else:
        partials = _call((pltpu.ARBITRARY, pltpu.ARBITRARY))

    # Tiny final reduction + scalar math in plain JAX.
    sums = jnp.sum(partials, axis=(0, 2, 3))       # (4,)
    focal_sum, inter, s_sum, t_sum = sums[0], sums[1], sums[2], sums[3]

    if pad:
        # Padded elements are exactly x=0, t=0: each contributes
        # 0.5**gamma * ln(2) to the focal sum and 0.5 to sigmoid(x); nothing to
        # the intersection or target sums.
        focal_sum = focal_sum - jnp.float32(pad * (0.5 ** g) * math.log(2.0))
        s_sum = s_sum - jnp.float32(pad * 0.5)

    if tail:
        tfoc, tint, ts, tt = _tail_sums(xf[n_main:], tf[n_main:], gamma=g)
        focal_sum = focal_sum + tfoc
        inter = inter + tint
        s_sum = s_sum + ts
        t_sum = t_sum + tt

    smooth = jnp.float32(1.0)
    focal_mean = focal_sum / jnp.float32(n)
    dice = (2.0 * inter + smooth) / (s_sum + t_sum + smooth)
    return jnp.float32(alpha) * focal_mean - jnp.log(dice)


def _mixed_loss_reference(x, target, *, alpha, gamma):
    x = x.astype(jnp.float32)
    t = target.astype(jnp.float32)
    # focal
    max_val = jnp.maximum(-x, 0.0)
    loss = x - x * t + max_val + jnp.log(jnp.exp(-max_val) + jnp.exp(-x - max_val))
    invprobs = jax.nn.log_sigmoid(-x * (t * 2.0 - 1.0))
    focal = jnp.mean(jnp.exp(invprobs * gamma) * loss)
    # dice
    s = jax.nn.sigmoid(x).reshape(-1)
    tf = t.reshape(-1)
    dice = (2.0 * jnp.sum(s * tf) + 1.0) / (jnp.sum(s) + jnp.sum(tf) + 1.0)
    return alpha * focal - jnp.log(dice)


if __name__ == "__main__":
    ALPHA = 10.0
    GAMMA = 2.0

    key = jax.random.PRNGKey(0)
    k1, k2, k3, k4, k5, k6 = jax.random.split(key, 6)

    # Case 1: NCHW logits / {0,1} float mask (B=2, C=4, H=W=16).
    # Binary fast path (no extra transcendentals), single aligned tile.
    x = jax.random.normal(k1, (2, 4, 16, 16), dtype=jnp.float32)
    target = (jax.random.uniform(k2, (2, 4, 16, 16)) > 0.5).astype(jnp.float32)
    loss = jax.block_until_ready(
        mixed_loss_pallas(x, target, alpha=ALPHA, gamma=GAMMA, binary_target=True))
    ref = _mixed_loss_reference(x, target, alpha=ALPHA, gamma=GAMMA)
    assert jnp.allclose(loss, ref, rtol=1e-5, atol=1e-5), (loss, ref)

    # Case 2: ragged size (not (8,128)-aligned), soft-label general path +
    # analytic zero-pad correction (no in-kernel mask).
    x_r = jax.random.normal(k3, (2, 3, 7, 9), dtype=jnp.float32)
    t_r = (jax.random.uniform(k4, (2, 3, 7, 9)) > 0.5).astype(jnp.float32)
    loss_r = jax.block_until_ready(mixed_loss_pallas(x_r, t_r, alpha=ALPHA, gamma=GAMMA))
    ref_r = _mixed_loss_reference(x_r, t_r, alpha=ALPHA, gamma=GAMMA)
    assert jnp.allclose(loss_r, ref_r, rtol=1e-5, atol=1e-5), (loss_r, ref_r)

    # Case 3: small max_block_rows forces multi-step accumulation plus a
    # plain-JAX tail (the no-full-pad path); binary fast path again.
    x_t = jax.random.normal(k5, (3, 5, 13, 11), dtype=jnp.float32)
    t_t = (jax.random.uniform(k6, (3, 5, 13, 11)) > 0.5).astype(jnp.float32)
    loss_t = jax.block_until_ready(
        mixed_loss_pallas(x_t, t_t, alpha=ALPHA, gamma=GAMMA,
                          binary_target=True, max_block_rows=8))
    ref_t = _mixed_loss_reference(x_t, t_t, alpha=ALPHA, gamma=GAMMA)
    assert jnp.allclose(loss_t, ref_t, rtol=1e-5, atol=1e-5), (loss_t, ref_t)

    print("KERNEL_OK")
</pallas_src>

<mosaic_0001>
module attributes {stable_mosaic.version = 11 : i64} {
  func.func @_mixed_loss_kernel(%arg0: i32, %arg1: i32, %arg2: memref<16x128xf32, #tpu.memory_space<vmem>>, %arg3: memref<16x128xf32, #tpu.memory_space<vmem>>, %arg4: memref<1x4x8x128xf32, #tpu.memory_space<vmem>>, %arg5: memref<4x8x128xf32, #tpu.memory_space<vmem>>) attributes {dimension_semantics = [#tpu.dimension_semantics<arbitrary>, #tpu.dimension_semantics<arbitrary>], iteration_bounds = array<i64: 1, 1>, scalar_prefetch = 0 : i64, scratch_operands = 1 : i64, tpu.core_type = #tpu.core_type<tc>, window_params = [{transform_indices = @transform_0, window_bounds = array<i64: 16, 128>}, {transform_indices = @transform_1, window_bounds = array<i64: 16, 128>}, {transform_indices = @transform_2, window_bounds = array<i64: 1, 4, 8, 128>}]} {
    %c0_i32 = arith.constant 0 : i32
    %0 = arith.cmpi eq, %arg1, %c0_i32 : i32
    %1 = arith.extui %0 : i1 to i32
    %c0_i32_0 = arith.constant 0 : i32
    %2 = arith.cmpi ne, %1, %c0_i32_0 : i32
    scf.if %2 {
      %cst_38 = arith.constant 0.000000e+00 : f32
      %70 = vector.broadcast %cst_38 : f32 to vector<4x8x128xf32>
      %c0_39 = arith.constant 0 : index
      %c0_40 = arith.constant 0 : index
      %c0_41 = arith.constant 0 : index
      %71 = vector.load %arg5[%c0_39, %c0_40, %c0_41] : memref<4x8x128xf32, #tpu.memory_space<vmem>>, vector<4x8x128xf32>
      tpu.vector_store %arg5[%c0_39, %c0_40, %c0_41], %70 {strides = array<i32>} : memref<4x8x128xf32, #tpu.memory_space<vmem>>, vector<4x8x128xf32>,
    } else {
    }
    %c0 = arith.constant 0 : index
    %c0_1 = arith.constant 0 : index
    %3 = vector.load %arg2[%c0, %c0_1] : memref<16x128xf32, #tpu.memory_space<vmem>>, vector<16x128xf32>
    %c0_2 = arith.constant 0 : index
    %c0_3 = arith.constant 0 : index
    %4 = vector.load %arg3[%c0_2, %c0_3] : memref<16x128xf32, #tpu.memory_space<vmem>>, vector<16x128xf32>
    %5 = math.absf %3 : vector<16x128xf32>
    %cst = arith.constant 0.000000e+00 : f32
    %6 = vector.broadcast %cst : f32 to vector<16x128xf32>
    %7 = arith.subf %6, %5 : vector<16x128xf32>
    %8 = math.exp %7 : vector<16x128xf32>
    %cst_4 = arith.constant 0.000000e+00 : f32
    %9 = vector.broadcast %cst_4 : f32 to vector<16x128xf32>
    %10 = arith.maximumf %3, %9 : vector<16x128xf32>
    %11 = arith.mulf %3, %4 : vector<16x128xf32>
    %12 = arith.subf %10, %11 : vector<16x128xf32>
    %cst_5 = arith.constant 1.000000e+00 : f32
    %13 = vector.broadcast %cst_5 : f32 to vector<16x128xf32>
    %14 = arith.addf %13, %8 : vector<16x128xf32>
    %15 = math.log %14 : vector<16x128xf32>
    %16 = arith.addf %12, %15 : vector<16x128xf32>
    %cst_6 = arith.constant 1.000000e+00 : f32
    %17 = vector.broadcast %cst_6 : f32 to vector<16x128xf32>
    %18 = arith.addf %17, %8 : vector<16x128xf32>
    %cst_7 = arith.constant 1.000000e+00 : f32
    %19 = vector.broadcast %cst_7 : f32 to vector<16x128xf32>
    %20 = arith.divf %19, %18 : vector<16x128xf32>
    %cst_8 = arith.constant 0.000000e+00 : f32
    %21 = vector.broadcast %cst_8 : f32 to vector<16x128xf32>
    %22 = arith.cmpf oge, %3, %21 : vector<16x128xf32>
    %23 = arith.mulf %8, %20 : vector<16x128xf32>
    %24 = arith.select %22, %20, %23 : vector<16x128xi1>, vector<16x128xf32>
    %cst_9 = arith.constant 0.000000e+00 : f32
    %25 = vector.broadcast %cst_9 : f32 to vector<16x128xf32>
    %26 = arith.cmpf oge, %3, %25 : vector<16x128xf32>
    %27 = arith.mulf %8, %20 : vector<16x128xf32>
    %28 = arith.select %26, %27, %20 : vector<16x128xi1>, vector<16x128xf32>
    %cst_10 = arith.constant 5.000000e-01 : f32
    %29 = vector.broadcast %cst_10 : f32 to vector<16x128xf32>
    %30 = arith.cmpf ogt, %4, %29 : vector<16x128xf32>
    %31 = arith.select %30, %28, %24 : vector<16x128xi1>, vector<16x128xf32>
    %32 = arith.mulf %31, %31 : vector<16x128xf32>
    %33 = arith.mulf %32, %16 : vector<16x128xf32>
    %c0_11 = arith.constant 0 : index
    %c0_12 = arith.constant 0 : index
    %c0_13 = arith.constant 0 : index
    %34 = vector.load %arg5[%c0_11, %c0_12, %c0_13] : memref<4x8x128xf32, #tpu.memory_space<vmem>>, vector<1x8x128xf32>
    %35 = vector.shape_cast %34 : vector<1x8x128xf32> to vector<8x128xf32>
    %36 = vector.shape_cast %33 : vector<16x128xf32> to vector<2x8x128xf32>
    %cst_14 = arith.constant dense<0.000000e+00> : vector<8x128xf32>
    %37 = vector.multi_reduction <add>, %36, %cst_14 [0] : vector<2x8x128xf32> to vector<8x128xf32>
    %38 = arith.addf %35, %37 : vector<8x128xf32>
    %c0_15 = arith.constant 0 : index
    %c0_16 = arith.constant 0 : index
    %c0_17 = arith.constant 0 : index
    %39 = vector.load %arg5[%c0_15, %c0_16, %c0_17] : memref<4x8x128xf32, #tpu.memory_space<vmem>>, vector<1x8x128xf32>
    %40 = vector.shape_cast %39 : vector<1x8x128xf32> to vector<8x128xf32>
    %41 = vector.shape_cast %38 : vector<8x128xf32> to vector<1x8x128xf32>
    tpu.vector_store %arg5[%c0_15, %c0_16, %c0_17], %41 {strides = array<i32>} : memref<4x8x128xf32, #tpu.memory_space<vmem>>, vector<1x8x128xf32>,
    %c1 = arith.constant 1 : index
    %c0_18 = arith.constant 0 : index
    %c0_19 = arith.constant 0 : index
    %42 = vector.load %arg5[%c1, %c0_18, %c0_19] : memref<4x8x128xf32, #tpu.memory_space<vmem>>, vector<1x8x128xf32>
    %43 = vector.shape_cast %42 : vector<1x8x128xf32> to vector<8x128xf32>
    %44 = arith.mulf %24, %4 : vector<16x128xf32>
    %45 = vector.shape_cast %44 : vector<16x128xf32> to vector<2x8x128xf32>
    %cst_20 = arith.constant dense<0.000000e+00> : vector<8x128xf32>
    %46 = vector.multi_reduction <add>, %45, %cst_20 [0] : vector<2x8x128xf32> to vector<8x128xf32>
    %47 = arith.addf %43, %46 : vector<8x128xf32>
    %c1_21 = arith.constant 1 : index
    %c0_22 = arith.constant 0 : index
    %c0_23 = arith.constant 0 : index
    %48 = vector.load %arg5[%c1_21, %c0_22, %c0_23] : memref<4x8x128xf32, #tpu.memory_space<vmem>>, vector<1x8x128xf32>
    %49 = vector.shape_cast %48 : vector<1x8x128xf32> to vector<8x128xf32>
    %50 = vector.shape_cast %47 : vector<8x128xf32> to vector<1x8x128xf32>
    tpu.vector_store %arg5[%c1_21, %c0_22, %c0_23], %50 {strides = array<i32>} : memref<4x8x128xf32, #tpu.memory_space<vmem>>, vector<1x8x128xf32>,
    %c2 = arith.constant 2 : index
    %c0_24 = arith.constant 0 : index
    %c0_25 = arith.constant 0 : index
    %51 = vector.load %arg5[%c2, %c0_24, %c0_25] : memref<4x8x128xf32, #tpu.memory_space<vmem>>, vector<1x8x128xf32>
    %52 = vector.shape_cast %51 : vector<1x8x128xf32> to vector<8x128xf32>
    %53 = vector.shape_cast %24 : vector<16x128xf32> to vector<2x8x128xf32>
    %cst_26 = arith.constant dense<0.000000e+00> : vector<8x128xf32>
    %54 = vector.multi_reduction <add>, %53, %cst_26 [0] : vector<2x8x128xf32> to vector<8x128xf32>
    %55 = arith.addf %52, %54 : vector<8x128xf32>
    %c2_27 = arith.constant 2 : index
    %c0_28 = arith.constant 0 : index
    %c0_29 = arith.constant 0 : index
    %56 = vector.load %arg5[%c2_27, %c0_28, %c0_29] : memref<4x8x128xf32, #tpu.memory_space<vmem>>, vector<1x8x128xf32>
    %57 = vector.shape_cast %56 : vector<1x8x128xf32> to vector<8x128xf32>
    %58 = vector.shape_cast %55 : vector<8x128xf32> to vector<1x8x128xf32>
    tpu.vector_store %arg5[%c2_27, %c0_28, %c0_29], %58 {strides = array<i32>} : memref<4x8x128xf32, #tpu.memory_space<vmem>>, vector<1x8x128xf32>,
    %c3 = arith.constant 3 : index
    %c0_30 = arith.constant 0 : index
    %c0_31 = arith.constant 0 : index
    %59 = vector.load %arg5[%c3, %c0_30, %c0_31] : memref<4x8x128xf32, #tpu.memory_space<vmem>>, vector<1x8x128xf32>
    %60 = vector.shape_cast %59 : vector<1x8x128xf32> to vector<8x128xf32>
    %61 = vector.shape_cast %4 : vector<16x128xf32> to vector<2x8x128xf32>
    %cst_32 = arith.constant dense<0.000000e+00> : vector<8x128xf32>
    %62 = vector.multi_reduction <add>, %61, %cst_32 [0] : vector<2x8x128xf32> to vector<8x128xf32>
    %63 = arith.addf %60, %62 : vector<8x128xf32>
    %c3_33 = arith.constant 3 : index
    %c0_34 = arith.constant 0 : index
    %c0_35 = arith.constant 0 : index
    %64 = vector.load %arg5[%c3_33, %c0_34, %c0_35] : memref<4x8x128xf32, #tpu.memory_space<vmem>>, vector<1x8x128xf32>
    %65 = vector.shape_cast %64 : vector<1x8x128xf32> to vector<8x128xf32>
    %66 = vector.shape_cast %63 : vector<8x128xf32> to vector<1x8x128xf32>
    tpu.vector_store %arg5[%c3_33, %c0_34, %c0_35], %66 {strides = array<i32>} : memref<4x8x128xf32, #tpu.memory_space<vmem>>, vector<1x8x128xf32>,
    %c0_i32_36 = arith.constant 0 : i32
    %67 = arith.cmpi eq, %arg1, %c0_i32_36 : i32
    %68 = arith.extui %67 : i1 to i32
    %c0_i32_37 = arith.constant 0 : i32
    %69 = arith.cmpi ne, %68, %c0_i32_37 : i32
    scf.if %69 {
      %c0_38 = arith.constant 0 : index
      %c0_39 = arith.constant 0 : index
      %c0_40 = arith.constant 0 : index
      %70 = vector.load %arg5[%c0_38, %c0_39, %c0_40] : memref<4x8x128xf32, #tpu.memory_space<vmem>>, vector<4x8x128xf32>
      %c0_41 = arith.constant 0 : index
      %c0_42 = arith.constant 0 : index
      %c0_43 = arith.constant 0 : index
      %c0_44 = arith.constant 0 : index
      %71 = vector.load %arg4[%c0_41, %c0_42, %c0_43, %c0_44] : memref<1x4x8x128xf32, #tpu.memory_space<vmem>>, vector<1x4x8x128xf32>
      %72 = vector.shape_cast %71 : vector<1x4x8x128xf32> to vector<4x8x128xf32>
      %73 = vector.shape_cast %70 : vector<4x8x128xf32> to vector<1x4x8x128xf32>
      tpu.vector_store %arg4[%c0_41, %c0_42, %c0_43, %c0_44], %73 {strides = array<i32>} : memref<1x4x8x128xf32, #tpu.memory_space<vmem>>, vector<1x4x8x128xf32>,
    } else {
    }
    return
  }
  func.func @transform_0(%arg0: i32, %arg1: i32) -> (i32, i32) {
    %c1_i32 = arith.constant 1 : i32
    %0 = arith.muli %arg0, %c1_i32 : i32
    %1 = arith.addi %0, %arg1 : i32
    %c0_i32 = arith.constant 0 : i32
    %c0_i32_0 = arith.constant 0 : i32
    return %1, %c0_i32 : i32, i32
  }
  func.func @transform_1(%arg0: i32, %arg1: i32) -> (i32, i32) {
    %c1_i32 = arith.constant 1 : i32
    %0 = arith.muli %arg0, %c1_i32 : i32
    %1 = arith.addi %0, %arg1 : i32
    %c0_i32 = arith.constant 0 : i32
    %c0_i32_0 = arith.constant 0 : i32
    return %1, %c0_i32 : i32, i32
  }
  func.func @transform_2(%arg0: i32, %arg1: i32) -> (i32, i32, i32, i32) {
    %c0_i32 = arith.constant 0 : i32
    %c0_i32_0 = arith.constant 0 : i32
    %c0_i32_1 = arith.constant 0 : i32
    %c0_i32_2 = arith.constant 0 : i32
    return %arg0, %c0_i32, %c0_i32_0, %c0_i32_1 : i32, i32, i32, i32
  }
}

</mosaic_0001>

<llo_original>
// kernel: tpu_custom_call.1
$region0: #{tpu_custom_call.1}
  #allocation0 [shape = 'u32[]', space=smem, size = 0x4, offset = 0x4, fixed_abs, tag = 'smem constant byte address 0x4 - core index']
  #allocation1 [shape = 'u32[144,128]{1,0:T(1,128)}', space=vmem, size = 0x12000, scoped, tag = 'internal scratch']
  #allocation2 [shape = 'f32[4,8,128]{2,1,0:T(8,128)}', space=vmem, size = 0x4000, scoped, tag = 'scratch operand']
  %s0 = inlined_call_operand.hbm [shape: f32[16,128], index: 0, kind: input, shape index: {}]
  %s1 = inlined_call_operand.hbm [shape: f32[16,128], index: 1, kind: input, shape index: {}]
  %s2 = inlined_call_operand.hbm [shape: f32[1,4,8,128], index: 2, kind: output, shape index: {}]
  %s3 = sld [smem:[#allocation0]]
  $region34: #{tpu_custom_call.1} parent=0
    _
  %s5 = ssub.s32 1, %s3
  %s6 = scalar_select 0, %s5, %s3
  $region1: #{tpu_custom_call.1} parent=0
    #allocation3 [shape = 'u8[8192]{0}', space=vmem, size = 0x2000, scoped, tag = 'input window, operand 0, single buffered']
    #allocation4 [shape = 's32[1]{0}', space=sflag, size = 0x4, scoped, tag = 'scoped memory for tpu_custom_call.1']
    #allocation5 [shape = 's32[1]{0}', space=sflag, size = 0x4, scoped, tag = 'scoped memory for tpu_custom_call.1']
    #allocation6 [shape = 'u8[8192]{0}', space=vmem, size = 0x2000, scoped, tag = 'input window, operand 1, single buffered']
    #allocation7 [shape = 's32[1]{0}', space=sflag, size = 0x4, scoped, tag = 'scoped memory for tpu_custom_call.1']
    #allocation8 [shape = 'u8[16384]{0}', space=vmem, size = 0x4000, scoped, tag = 'output window, operand 0, single buffered']
    %7 = vsyncpa [#allocation4], 0
    %8 = vsyncpa [#allocation7], 0
    %9 = vsyncpa [#allocation5], 0
    // Predicated region
    $region2: #{tpu_custom_call.1} parent=1 // pred_check
      _
    $region3: #{tpu_custom_call.1} parent=1 // pred_check_branch
      %11 = sbr.rel (0) target = $region5
    $region4: #{tpu_custom_call.1} parent=1 // pred_region
      %s12 = sadd.s32 0, 0
      %s13 = smul.u32 2, %s12
      %s15 = ssub.s32 256, 256
      %16 = vsyncadd [#allocation4], %s15
      %s17 = smul.addr %s13, 128
      %s18 = scalar_lea.hbm %s0, %s17
      %s19 = sshll.u32 [#allocation3], 4
      %s20 = int_to_ptr.vmem [resolvable:$true] %s19
      %25 = dma.hbm_to_vmem [thread:$0]  %s18, 256, %s20, [#allocation4], 128, 128, 8
    $region5: #{tpu_custom_call.1} parent=1 // pred_fallthru
      _
    // Predicated region
    $region6: #{tpu_custom_call.1} parent=1 // pred_check
      _
    $region7: #{tpu_custom_call.1} parent=1 // pred_check_branch
      %27 = sbr.rel (0) target = $region9
    $region8: #{tpu_custom_call.1} parent=1 // pred_region
      %s28 = sadd.s32 0, 0
      %s29 = smul.u32 2, %s28
      %s31 = ssub.s32 256, 256
      %32 = vsyncadd [#allocation7], %s31
      %s33 = smul.addr %s29, 128
      %s34 = scalar_lea.hbm %s1, %s33
      %s35 = sshll.u32 [#allocation6], 4
      %s36 = int_to_ptr.vmem [resolvable:$true] %s35
      %41 = dma.hbm_to_vmem [thread:$0]  %s34, 256, %s36, [#allocation7], 128, 128, 8
    $region9: #{tpu_custom_call.1} parent=1 // pred_fallthru
      _
    // Predicated region
    $region10: #{tpu_custom_call.1} parent=1 // pred_check
      _
    $region11: #{tpu_custom_call.1} parent=1 // pred_check_branch
      %43 = sbr.rel (0) target = $region13
    $region12: #{tpu_custom_call.1} parent=1 // pred_region
      %44 = dma.done [#allocation4], 256
    $region13: #{tpu_custom_call.1} parent=1 // pred_fallthru
      _
    // Predicated region
    $region14: #{tpu_custom_call.1} parent=1 // pred_check
      _
    $region15: #{tpu_custom_call.1} parent=1 // pred_check_branch
      %46 = sbr.rel (0) target = $region17
    $region16: #{tpu_custom_call.1} parent=1 // pred_region
      %47 = dma.done [#allocation7], 256
    $region17: #{tpu_custom_call.1} parent=1 // pred_fallthru
      _
    %s48 = sadd.s32 0, 0
    %s49 = smul.u32 2, %s48
    %s50 = sadd.s32 0, 0
    %s51 = smul.u32 2, %s50
    %p52 = scmp.eq.s32.totalorder 0, 0
    // Predicated region
    $region18: #{tpu_custom_call.1} parent=1 // pred_check
      %p53 = pneg %p52
    $region19: #{tpu_custom_call.1} parent=1 // pred_check_branch
      %55 = sbr.rel (%p53) target = $region21
    $region20: #{tpu_custom_call.1} parent=1 // pred_region
      %56 = vst [vmem:[#allocation2] sm:$0xff] 0.0
      %57 = vst [vmem:[#allocation2 + $0x8] sm:$0xff] 0.0
      %58 = vst [vmem:[#allocation2 + $0x10] sm:$0xff] 0.0
      %59 = vst [vmem:[#allocation2 + $0x18] sm:$0xff] 0.0
    $region21: #{tpu_custom_call.1} parent=1 // pred_fallthru
      _
    %v60 = vld [vmem:[#allocation3] sm:$0xff]
    %v61 = vld [vmem:[#allocation3 + $0x8] sm:$0xff]
    %v62 = vld [vmem:[#allocation6] sm:$0xff]
    %v63 = vld [vmem:[#allocation6 + $0x8] sm:$0xff]
    %v64 = vand.u32 2147483647, %v60
    %v65 = vand.u32 2147483647, %v61
    %v66 = vsub.f32 0.0, %v64
    %v67 = vsub.f32 0.0, %v65
    %v68 = vmul.f32 %v66, 1.442695
    %v69 = vpow.pop %v68
    %v70 = vmul.f32 %v67, 1.442695
    %v71 = vpow.pop %v70
    %v72 = vmax.f32 %v60, 0.0
    %v73 = vmax.f32 %v61, 0.0
    %v74 = vmul.f32 %v60, %v62
    %v75 = vmul.f32 %v61, %v63
    %v76 = vsub.f32 %v72, %v74
    %v77 = vsub.f32 %v73, %v75
    %v78 = vadd.f32 %v69, 1.0
    %v79 = vadd.f32 %v71, 1.0
    %v80 = vlog2.pop %v78
    %v81 = vmul.f32 %v80, 0.6931472
    %v82 = vlog2.pop %v79
    %v83 = vmul.f32 %v82, 0.6931472
    %v84 = vadd.f32 %v76, %v81
    %v85 = vadd.f32 %v77, %v83
    %v86 = vrcp.pop %v78
    %v87 = vmul.f32 1.0, %v86
    %v88 = vrcp.pop %v79
    %v89 = vmul.f32 1.0, %v88
    %vm90 = vcmp.ge.f32.partialorder %v60, 0.0
    %vm91 = vcmp.ge.f32.partialorder %v61, 0.0
    %v92 = vmul.f32 %v69, %v87
    %v93 = vmul.f32 %v71, %v89
    %v94 = vsel %vm90, %v87, %v92
    %v95 = vsel %vm91, %v89, %v93
    %v96 = vsel %vm90, %v92, %v87
    %v97 = vsel %vm91, %v93, %v89
    %vm98 = vcmp.gt.f32.partialorder %v62, 0.5
    %vm99 = vcmp.gt.f32.partialorder %v63, 0.5
    %v100 = vsel %vm98, %v96, %v94
    %v101 = vsel %vm99, %v97, %v95
    %v102 = vmul.f32 %v100, %v100
    %v103 = vmul.f32 %v101, %v101
    %v104 = vmul.f32 %v102, %v84
    %v105 = vmul.f32 %v103, %v85
    %v106 = vld [vmem:[#allocation2] sm:$0xff]
    %v107 = vadd.f32 %v104, %v105
    %v108 = vadd.f32 %v106, %v107
    %109 = vst [vmem:[#allocation2] sm:$0xff] %v108
    %s110 = scalar_lea.vmem [#allocation2], 8
    %v111 = vld [vmem:[%s110] sm:$0xff]
    %v112 = vmul.f32 %v94, %v62
    %v113 = vmul.f32 %v95, %v63
    %v114 = vadd.f32 %v112, %v113
    %v115 = vadd.f32 %v111, %v114
    %116 = vst [vmem:[%s110] sm:$0xff] %v115
    %s117 = scalar_lea.vmem [#allocation2], 16
    %v118 = vld [vmem:[%s117] sm:$0xff]
    %v119 = vadd.f32 %v94, %v95
    %v120 = vadd.f32 %v118, %v119
    %121 = vst [vmem:[%s117] sm:$0xff] %v120
    %s122 = scalar_lea.vmem [#allocation2], 24
    %v123 = vld [vmem:[%s122] sm:$0xff]
    %v124 = vadd.f32 %v62, %v63
    %v125 = vadd.f32 %v123, %v124
    %126 = vst [vmem:[%s122] sm:$0xff] %v125
    // Predicated region
    $region22: #{tpu_custom_call.1} parent=1 // pred_check
      %p127 = pneg %p52
    $region23: #{tpu_custom_call.1} parent=1 // pred_check_branch
      %129 = sbr.rel (%p127) target = $region25
    $region24: #{tpu_custom_call.1} parent=1 // pred_region
      %v130 = vld [vmem:[#allocation2] sm:$0xff]
      %v131 = vld [vmem:[#allocation2 + $0x8] sm:$0xff]
      %v132 = vld [vmem:[#allocation2 + $0x10] sm:$0xff]
      %v133 = vld [vmem:[#allocation2 + $0x18] sm:$0xff]
      %134 = vst [vmem:[#allocation8] sm:$0xff] %v130
      %135 = vst [vmem:[#allocation8 + $0x8] sm:$0xff] %v131
      %136 = vst [vmem:[#allocation8 + $0x10] sm:$0xff] %v132
      %137 = vst [vmem:[#allocation8 + $0x18] sm:$0xff] %v133
    $region25: #{tpu_custom_call.1} parent=1 // pred_fallthru
      _
    // Predicated region
    $region26: #{tpu_custom_call.1} parent=1 // pred_check
      _
    $region27: #{tpu_custom_call.1} parent=1 // pred_check_branch
      %139 = sbr.rel (0) target = $region29
    $region28: #{tpu_custom_call.1} parent=1 // pred_region
      %s141 = ssub.s32 512, 512
      %142 = vsyncadd [#allocation5], %s141
      %s143 = sshll.u32 [#allocation8], 4
      %s144 = int_to_ptr.vmem [resolvable:$true] %s143
      %149 = dma.vmem_to_hbm [thread:$0]  %s144, 512, %s2, [#allocation5], 128, 128, 8
    $region29: #{tpu_custom_call.1} parent=1 // pred_fallthru
      _
    // Predicated region
    $region30: #{tpu_custom_call.1} parent=1 // pred_check
      _
    $region31: #{tpu_custom_call.1} parent=1 // pred_check_branch
      %151 = sbr.rel (0) target = $region33
    $region32: #{tpu_custom_call.1} parent=1 // pred_region
      %152 = dma.done [#allocation5], 512
    $region33: #{tpu_custom_call.1} parent=1 // pred_fallthru
      _
    %153 = vsyncpa [#allocation4], 1
    %154 = vsyncpa [#allocation7], 1
    %155 = vsyncpa [#allocation5], 1

</llo_original>
